<compile_context>
chip_gen: v5e
topology: v5e:2x2
jax: 0.10.0
libtpu: 0.0.40
codegen_flags: <defaults>
</compile_context>

<pallas_src>
import functools

import jax
import jax.numpy as jnp
from jax import lax
from jax.experimental import pallas as pl
from jax.experimental.pallas import tpu as pltpu

DIMS = (64, 32, 16, 8, 4, 1)
LANE = 128


def _round_up(x, m):
    return (x + m - 1) // m * m


def _mlp_kernel(x_ref,
                w1_ref, b1_ref,
                w2_ref, b2_ref,
                w3_ref, b3_ref,
                w4_ref, b4_ref,
                w5_ref, b5_ref,
                o_ref):
    """Fused 5-layer MLP on a (tb, 64) native-layout input tile.

    Layer 1 contracts the feature dim of both operands (W1 @ x^T), putting the
    batch on the lane axis of every subsequent activation, so bias/ReLU VPU work
    and the final (1, tb) store are lane-dense.
    """
    x_bf = x_ref[...].astype(jnp.bfloat16)                      # (tb, 64) bf16

    # (32, 64) · (tb, 64) contracted on the 64-dim -> (32, tb), f32 accumulate.
    h = lax.dot_general(
        w1_ref[...], x_bf,
        dimension_numbers=(((1,), (1,)), ((), ())),
        preferred_element_type=jnp.float32,
    )
    h = jnp.maximum(h + b1_ref[...], 0.0)                       # (32, tb) f32

    def dense_relu(w_ref, b_ref, h_f32):
        acc = jnp.dot(w_ref[...], h_f32.astype(jnp.bfloat16),
                      preferred_element_type=jnp.float32)
        return jnp.maximum(acc + b_ref[...], 0.0)

    h = dense_relu(w2_ref, b2_ref, h)                           # (16, tb)
    h = dense_relu(w3_ref, b3_ref, h)                           # (8,  tb)
    h = dense_relu(w4_ref, b4_ref, h)                           # (4,  tb)
    h = dense_relu(w5_ref, b5_ref, h)                           # (1,  tb)
    o_ref[...] = h.astype(o_ref.dtype)                          # lane-dense vst


@functools.partial(jax.jit, static_argnames=("block_batch",))
def regression_forward(x, params, *, block_batch=16384):
    """x: (batch, 64) f32; params: [(W, b)] with W=(out, in), b=(out,)."""
    batch, in_dim = x.shape
    assert in_dim == DIMS[0]
    out_dim = params[-1][0].shape[0]

    # Only tiny batches get padded (to a single 128-lane tile); larger batches
    # are handled ragged by grid = cdiv(batch, tb) and the final [:batch] slice.
    if batch < LANE:
        x_in = jnp.pad(x, ((0, LANE - batch), (0, 0)))
        batch_eff = LANE
    else:
        x_in = x
        batch_eff = batch

    # Batch tile: multiple of 128; >= 2 tiles whenever batch > 128 (v7x megacore
    # sharding of the "parallel" grid axis); capped so VMEM stays comfortable.
    tb = min(_round_up(block_batch, LANE),
             _round_up(pl.cdiv(batch_eff, 2), LANE),
             32768)
    tb = max(tb, LANE)
    n_tiles = pl.cdiv(batch_eff, tb)

    flat = []
    in_specs = [pl.BlockSpec((tb, in_dim), lambda i: (i, 0))]
    weight_bytes = 0
    for w, b in params:
        w_bf = w.astype(jnp.bfloat16)                     # (out, in) bf16
        b2 = b.reshape(-1, 1).astype(jnp.float32)         # (out, 1)  f32
        flat += [w_bf, b2]
        # Constant index maps: the block index never changes across the grid,
        # so Pallas keeps these operands VMEM-resident (no per-step DMA).
        in_specs += [
            pl.BlockSpec(w_bf.shape, lambda i: (0, 0)),
            pl.BlockSpec(b2.shape, lambda i: (0, 0)),
        ]
        weight_bytes += w_bf.size * 2 + b2.size * 4

    flops_per_row = 2 * sum(DIMS[i] * DIMS[i + 1] for i in range(len(DIMS) - 1))
    cost = pl.CostEstimate(
        flops=flops_per_row * batch_eff,
        transcendentals=0,
        bytes_accessed=batch_eff * (in_dim * 4 + out_dim * 4) + weight_bytes,
    )

    # VMEM sizing including compiler-materialized intermediates:
    #   double-buffered f32 x tile, in-kernel bf16 x cast, f32 accumulators for
    #   every layer, bf16 re-casts fed to the next matmul, double-buffered out.
    hidden_f32 = sum(DIMS[1:])        # 61 f32 accumulator rows per batch column
    hidden_bf16 = sum(DIMS[1:-1])     # 60 bf16 activation rows per batch column
    bytes_per_row = (2 * in_dim * 4 + in_dim * 2
                     + hidden_f32 * 4 + hidden_bf16 * 2
                     + 2 * out_dim * 4)
    vmem_need = tb * bytes_per_row + weight_bytes
    vmem_limit = int(min(max(2 * vmem_need, 16 * 1024 * 1024), 48 * 1024 * 1024))

    out_t = pl.pallas_call(
        _mlp_kernel,
        out_shape=jax.ShapeDtypeStruct((out_dim, batch_eff), jnp.float32),
        grid_spec=pltpu.PrefetchScalarGridSpec(
            num_scalar_prefetch=0,
            grid=(n_tiles,),
            in_specs=in_specs,
            out_specs=pl.BlockSpec((out_dim, tb), lambda i: (0, i)),
        ),
        compiler_params=pltpu.CompilerParams(
            dimension_semantics=("parallel",),
            vmem_limit_bytes=vmem_limit,
        ),
        cost_estimate=cost,
    )(x_in, *flat)

    # (1, batch_eff) -> (batch, 1); padded / ragged columns are sliced off.
    return out_t[0, :batch].reshape(batch, 1)


def init_params(key, dims):
    """Mimic nn.Linear init: W=(out, in), b=(out,), U(-1/sqrt(fan_in), 1/sqrt(fan_in))."""
    params = []
    for i in range(len(dims) - 1):
        fan_in, fan_out = dims[i], dims[i + 1]
        key, kw, kb = jax.random.split(key, 3)
        bound = 1.0 / jnp.sqrt(fan_in)
        w = jax.random.uniform(kw, (fan_out, fan_in), jnp.float32, -bound, bound)
        b = jax.random.uniform(kb, (fan_out,), jnp.float32, -bound, bound)
        params.append((w, b))
    return params


if __name__ == "__main__":
    key = jax.random.PRNGKey(0)
    k_x, k_p = jax.random.split(key)

    batch = 8                                     # module spec: (N, 64) features
    x = jax.random.normal(k_x, (batch, DIMS[0]), dtype=jnp.float32)
    params = init_params(k_p, DIMS)

    out = regression_forward(x, params)
    out = jax.block_until_ready(out)
    assert out.shape == (batch, 1)

    # Pure-JAX reference emulating the same bf16-matmul / f32-accumulate path.
    h = x.astype(jnp.bfloat16).astype(jnp.float32)
    for li, (w, b) in enumerate(params):
        wf = w.astype(jnp.bfloat16).astype(jnp.float32)
        h = jnp.maximum(
            jnp.dot(h, wf.T, precision=jax.lax.Precision.HIGHEST) + b.reshape(1, -1),
            0.0,
        )
        if li != len(params) - 1:
            h = h.astype(jnp.bfloat16).astype(jnp.float32)
    ref = h                                        # (batch, 1)

    assert jnp.allclose(out, ref, atol=1e-3, rtol=1e-3), (
        f"max abs err {jnp.max(jnp.abs(out - ref))}")

    print("KERNEL_OK")
</pallas_src>

<mosaic_0001>
module attributes {stable_mosaic.version = 11 : i64} {
  func.func @_mlp_kernel(%arg0: i32, %arg1: memref<128x64xf32, #tpu.memory_space<vmem>>, %arg2: memref<32x64xbf16, #tpu.memory_space<vmem>>, %arg3: memref<32x1xf32, #tpu.memory_space<vmem>>, %arg4: memref<16x32xbf16, #tpu.memory_space<vmem>>, %arg5: memref<16x1xf32, #tpu.memory_space<vmem>>, %arg6: memref<8x16xbf16, #tpu.memory_space<vmem>>, %arg7: memref<8x1xf32, #tpu.memory_space<vmem>>, %arg8: memref<4x8xbf16, #tpu.memory_space<vmem>>, %arg9: memref<4x1xf32, #tpu.memory_space<vmem>>, %arg10: memref<1x4xbf16, #tpu.memory_space<vmem>>, %arg11: memref<1x1xf32, #tpu.memory_space<vmem>>, %arg12: memref<1x128xf32, #tpu.memory_space<vmem>>) attributes {dimension_semantics = [#tpu.dimension_semantics<parallel>], iteration_bounds = array<i64: 1>, scalar_prefetch = 0 : i64, scratch_operands = 0 : i64, tpu.core_type = #tpu.core_type<tc>, window_params = [{transform_indices = @transform_0, window_bounds = array<i64: 128, 64>}, {pipeline_mode = #tpu.pipeline_mode<synchronous>, transform_indices = @transform_1, window_bounds = array<i64: 32, 64>}, {pipeline_mode = #tpu.pipeline_mode<synchronous>, transform_indices = @transform_2, window_bounds = array<i64: 32, 1>}, {pipeline_mode = #tpu.pipeline_mode<synchronous>, transform_indices = @transform_3, window_bounds = array<i64: 16, 32>}, {pipeline_mode = #tpu.pipeline_mode<synchronous>, transform_indices = @transform_4, window_bounds = array<i64: 16, 1>}, {pipeline_mode = #tpu.pipeline_mode<synchronous>, transform_indices = @transform_5, window_bounds = array<i64: 8, 16>}, {pipeline_mode = #tpu.pipeline_mode<synchronous>, transform_indices = @transform_6, window_bounds = array<i64: 8, 1>}, {pipeline_mode = #tpu.pipeline_mode<synchronous>, transform_indices = @transform_7, window_bounds = array<i64: 4, 8>}, {pipeline_mode = #tpu.pipeline_mode<synchronous>, transform_indices = @transform_8, window_bounds = array<i64: 4, 1>}, {pipeline_mode = #tpu.pipeline_mode<synchronous>, transform_indices = @transform_9, window_bounds = array<i64: 1, 4>}, {pipeline_mode = #tpu.pipeline_mode<synchronous>, transform_indices = @transform_10, window_bounds = array<i64: 1, 1>}, {transform_indices = @transform_11, window_bounds = array<i64: 1, 128>}]} {
    %c0 = arith.constant 0 : index
    %c0_0 = arith.constant 0 : index
    %0 = vector.load %arg1[%c0, %c0_0] : memref<128x64xf32, #tpu.memory_space<vmem>>, vector<128x64xf32>
    %1 = arith.truncf %0 : vector<128x64xf32> to vector<128x64xbf16>
    %c0_1 = arith.constant 0 : index
    %c0_2 = arith.constant 0 : index
    %2 = vector.load %arg2[%c0_1, %c0_2] : memref<32x64xbf16, #tpu.memory_space<vmem>>, vector<32x64xbf16>
    %cst = arith.constant dense<0.000000e+00> : vector<32x128xf32>
    %3 = tpu.matmul %2, %1, %cst {dimension_numbers = #tpu.dot_dimension_numbers<[1], [1], [0], [0], [0, 0, 1, 0], [], []>} : vector<32x64xbf16>, vector<128x64xbf16>, vector<32x128xf32> -> vector<32x128xf32>
    %c0_3 = arith.constant 0 : index
    %c0_4 = arith.constant 0 : index
    %4 = vector.load %arg3[%c0_3, %c0_4] : memref<32x1xf32, #tpu.memory_space<vmem>>, vector<32x1xf32>
    %5 = vector.broadcast %4 : vector<32x1xf32> to vector<32x128xf32>
    %6 = arith.addf %3, %5 : vector<32x128xf32>
    %cst_5 = arith.constant 0.000000e+00 : f32
    %7 = vector.broadcast %cst_5 : f32 to vector<32x128xf32>
    %8 = arith.maximumf %6, %7 : vector<32x128xf32>
    %c0_6 = arith.constant 0 : index
    %c0_7 = arith.constant 0 : index
    %9 = vector.load %arg4[%c0_6, %c0_7] : memref<16x32xbf16, #tpu.memory_space<vmem>>, vector<16x32xbf16>
    %10 = arith.truncf %8 : vector<32x128xf32> to vector<32x128xbf16>
    %cst_8 = arith.constant dense<0.000000e+00> : vector<16x128xf32>
    %11 = tpu.matmul %9, %10, %cst_8 {dimension_numbers = #tpu.dot_dimension_numbers<[1], [0], [0], [1], [0, 0, 1, 1], [], []>} : vector<16x32xbf16>, vector<32x128xbf16>, vector<16x128xf32> -> vector<16x128xf32>
    %c0_9 = arith.constant 0 : index
    %c0_10 = arith.constant 0 : index
    %12 = vector.load %arg5[%c0_9, %c0_10] : memref<16x1xf32, #tpu.memory_space<vmem>>, vector<16x1xf32>
    %13 = vector.broadcast %12 : vector<16x1xf32> to vector<16x128xf32>
    %14 = arith.addf %11, %13 : vector<16x128xf32>
    %cst_11 = arith.constant 0.000000e+00 : f32
    %15 = vector.broadcast %cst_11 : f32 to vector<16x128xf32>
    %16 = arith.maximumf %14, %15 : vector<16x128xf32>
    %c0_12 = arith.constant 0 : index
    %c0_13 = arith.constant 0 : index
    %17 = vector.load %arg6[%c0_12, %c0_13] : memref<8x16xbf16, #tpu.memory_space<vmem>>, vector<8x16xbf16>
    %18 = arith.truncf %16 : vector<16x128xf32> to vector<16x128xbf16>
    %cst_14 = arith.constant dense<0.000000e+00> : vector<8x128xf32>
    %19 = tpu.matmul %17, %18, %cst_14 {dimension_numbers = #tpu.dot_dimension_numbers<[1], [0], [0], [1], [0, 0, 1, 1], [], []>} : vector<8x16xbf16>, vector<16x128xbf16>, vector<8x128xf32> -> vector<8x128xf32>
    %c0_15 = arith.constant 0 : index
    %c0_16 = arith.constant 0 : index
    %20 = vector.load %arg7[%c0_15, %c0_16] : memref<8x1xf32, #tpu.memory_space<vmem>>, vector<8x1xf32>
    %21 = vector.broadcast %20 : vector<8x1xf32> to vector<8x128xf32>
    %22 = arith.addf %19, %21 : vector<8x128xf32>
    %cst_17 = arith.constant 0.000000e+00 : f32
    %23 = vector.broadcast %cst_17 : f32 to vector<8x128xf32>
    %24 = arith.maximumf %22, %23 : vector<8x128xf32>
    %c0_18 = arith.constant 0 : index
    %c0_19 = arith.constant 0 : index
    %25 = vector.load %arg8[%c0_18, %c0_19] : memref<4x8xbf16, #tpu.memory_space<vmem>>, vector<4x8xbf16>
    %26 = arith.truncf %24 : vector<8x128xf32> to vector<8x128xbf16>
    %cst_20 = arith.constant dense<0.000000e+00> : vector<4x128xf32>
    %27 = tpu.matmul %25, %26, %cst_20 {dimension_numbers = #tpu.dot_dimension_numbers<[1], [0], [0], [1], [0, 0, 1, 1], [], []>} : vector<4x8xbf16>, vector<8x128xbf16>, vector<4x128xf32> -> vector<4x128xf32>
    %c0_21 = arith.constant 0 : index
    %c0_22 = arith.constant 0 : index
    %28 = vector.load %arg9[%c0_21, %c0_22] : memref<4x1xf32, #tpu.memory_space<vmem>>, vector<4x1xf32>
    %29 = vector.broadcast %28 : vector<4x1xf32> to vector<4x128xf32>
    %30 = arith.addf %27, %29 : vector<4x128xf32>
    %cst_23 = arith.constant 0.000000e+00 : f32
    %31 = vector.broadcast %cst_23 : f32 to vector<4x128xf32>
    %32 = arith.maximumf %30, %31 : vector<4x128xf32>
    %c0_24 = arith.constant 0 : index
    %c0_25 = arith.constant 0 : index
    %33 = vector.load %arg10[%c0_24, %c0_25] : memref<1x4xbf16, #tpu.memory_space<vmem>>, vector<1x4xbf16>
    %34 = arith.truncf %32 : vector<4x128xf32> to vector<4x128xbf16>
    %cst_26 = arith.constant dense<0.000000e+00> : vector<1x128xf32>
    %35 = tpu.matmul %33, %34, %cst_26 {dimension_numbers = #tpu.dot_dimension_numbers<[1], [0], [0], [1], [0, 0, 1, 1], [], []>} : vector<1x4xbf16>, vector<4x128xbf16>, vector<1x128xf32> -> vector<1x128xf32>
    %c0_27 = arith.constant 0 : index
    %c0_28 = arith.constant 0 : index
    %36 = vector.load %arg11[%c0_27, %c0_28] : memref<1x1xf32, #tpu.memory_space<vmem>>, vector<1x1xf32>
    %37 = vector.broadcast %36 : vector<1x1xf32> to vector<1x128xf32>
    %38 = arith.addf %35, %37 : vector<1x128xf32>
    %cst_29 = arith.constant 0.000000e+00 : f32
    %39 = vector.broadcast %cst_29 : f32 to vector<1x128xf32>
    %40 = arith.maximumf %38, %39 : vector<1x128xf32>
    %c0_30 = arith.constant 0 : index
    %c0_31 = arith.constant 0 : index
    %41 = vector.load %arg12[%c0_30, %c0_31] : memref<1x128xf32, #tpu.memory_space<vmem>>, vector<1x128xf32>
    tpu.vector_store %arg12[%c0_30, %c0_31], %40 {strides = array<i32>} : memref<1x128xf32, #tpu.memory_space<vmem>>, vector<1x128xf32>,
    return
  }
  func.func @transform_0(%arg0: i32) -> (i32, i32) {
    %c0_i32 = arith.constant 0 : i32
    %c0_i32_0 = arith.constant 0 : i32
    return %arg0, %c0_i32 : i32, i32
  }
  func.func @transform_1(%arg0: i32) -> (i32, i32) {
    %c0_i32 = arith.constant 0 : i32
    %c0_i32_0 = arith.constant 0 : i32
    %c0_i32_1 = arith.constant 0 : i32
    return %c0_i32, %c0_i32_0 : i32, i32
  }
  func.func @transform_2(%arg0: i32) -> (i32, i32) {
    %c0_i32 = arith.constant 0 : i32
    %c0_i32_0 = arith.constant 0 : i32
    %c0_i32_1 = arith.constant 0 : i32
    return %c0_i32, %c0_i32_0 : i32, i32
  }
  func.func @transform_3(%arg0: i32) -> (i32, i32) {
    %c0_i32 = arith.constant 0 : i32
    %c0_i32_0 = arith.constant 0 : i32
    %c0_i32_1 = arith.constant 0 : i32
    return %c0_i32, %c0_i32_0 : i32, i32
  }
  func.func @transform_4(%arg0: i32) -> (i32, i32) {
    %c0_i32 = arith.constant 0 : i32
    %c0_i32_0 = arith.constant 0 : i32
    %c0_i32_1 = arith.constant 0 : i32
    return %c0_i32, %c0_i32_0 : i32, i32
  }
  func.func @transform_5(%arg0: i32) -> (i32, i32) {
    %c0_i32 = arith.constant 0 : i32
    %c0_i32_0 = arith.constant 0 : i32
    %c0_i32_1 = arith.constant 0 : i32
    return %c0_i32, %c0_i32_0 : i32, i32
  }
  func.func @transform_6(%arg0: i32) -> (i32, i32) {
    %c0_i32 = arith.constant 0 : i32
    %c0_i32_0 = arith.constant 0 : i32
    %c0_i32_1 = arith.constant 0 : i32
    return %c0_i32, %c0_i32_0 : i32, i32
  }
  func.func @transform_7(%arg0: i32) -> (i32, i32) {
    %c0_i32 = arith.constant 0 : i32
    %c0_i32_0 = arith.constant 0 : i32
    %c0_i32_1 = arith.constant 0 : i32
    return %c0_i32, %c0_i32_0 : i32, i32
  }
  func.func @transform_8(%arg0: i32) -> (i32, i32) {
    %c0_i32 = arith.constant 0 : i32
    %c0_i32_0 = arith.constant 0 : i32
    %c0_i32_1 = arith.constant 0 : i32
    return %c0_i32, %c0_i32_0 : i32, i32
  }
  func.func @transform_9(%arg0: i32) -> (i32, i32) {
    %c0_i32 = arith.constant 0 : i32
    %c0_i32_0 = arith.constant 0 : i32
    %c0_i32_1 = arith.constant 0 : i32
    return %c0_i32, %c0_i32_0 : i32, i32
  }
  func.func @transform_10(%arg0: i32) -> (i32, i32) {
    %c0_i32 = arith.constant 0 : i32
    %c0_i32_0 = arith.constant 0 : i32
    %c0_i32_1 = arith.constant 0 : i32
    return %c0_i32, %c0_i32_0 : i32, i32
  }
  func.func @transform_11(%arg0: i32) -> (i32, i32) {
    %c0_i32 = arith.constant 0 : i32
    %c0_i32_0 = arith.constant 0 : i32
    return %c0_i32, %arg0 : i32, i32
  }
}

</mosaic_0001>

<llo_original>
// kernel: regression_forward.1
$region0: #{regression_forward.1}
  #allocation0 [shape = 'u32[]', space=smem, size = 0x4, offset = 0x4, fixed_abs, tag = 'smem constant byte address 0x4 - core index']
  #allocation1 [shape = 'u32[72,128]{1,0:T(1,128)}', space=vmem, size = 0x9000, scoped, tag = 'internal scratch']
  #allocation2 [shape = 'f32[1,1]{1,0:T(1,128)S(1)}', space=vmem, size = 0x200, scoped, tag = 'scoped memory for regression_forward.1']
  %s0 = inlined_call_operand.vmem [shape: f32[128,64], index: 0, kind: input, shape index: {}]
  %s1 = inlined_call_operand.vmem [shape: bf16[32,64], index: 1, kind: input, shape index: {}]
  %s2 = inlined_call_operand.vmem [shape: f32[32,1], index: 2, kind: input, shape index: {}]
  %s3 = inlined_call_operand.vmem [shape: bf16[16,32], index: 3, kind: input, shape index: {}]
  %s4 = inlined_call_operand.vmem [shape: f32[16,1], index: 4, kind: input, shape index: {}]
  %s5 = inlined_call_operand.vmem [shape: bf16[8,16], index: 5, kind: input, shape index: {}]
  %s6 = inlined_call_operand.vmem [shape: f32[8,1], index: 6, kind: input, shape index: {}]
  %s7 = inlined_call_operand.vmem [shape: bf16[4,8], index: 7, kind: input, shape index: {}]
  %s8 = inlined_call_operand.vmem [shape: f32[4,1], index: 8, kind: input, shape index: {}]
  %s9 = inlined_call_operand.vmem [shape: bf16[1,4], index: 9, kind: input, shape index: {}]
  %s10 = inlined_call_operand.<no memory space> [shape: f32[1,1], index: 10, kind: input, shape index: {}]
  %s11 = inlined_call_operand.vmem [shape: f32[1,128], index: 11, kind: output, shape index: {}]
  %s12 = sld [smem:[#allocation0]]
  $region54: #{regression_forward.1} parent=0
    _
  %s14 = ssub.s32 1, %s12
  %s15 = scalar_select 0, %s14, %s12
  %v16 = vstv %s10
  %17 = vst [vmem:[#allocation2] sm:$0x1] %v16
  // Predicated region
  $region2: #{regression_forward.1} parent=0 // pred_check
    _
  $region3: #{regression_forward.1} parent=0 // pred_check_branch
    %19 = sbr.rel (0) target = $region5
  $region4: #{regression_forward.1} parent=0 // pred_region
    _
  $region5: #{regression_forward.1} parent=0 // pred_fallthru
    _
  // Predicated region
  $region6: #{regression_forward.1} parent=0 // pred_check
    _
  $region7: #{regression_forward.1} parent=0 // pred_check_branch
    %21 = sbr.rel (0) target = $region9
  $region8: #{regression_forward.1} parent=0 // pred_region
    _
  $region9: #{regression_forward.1} parent=0 // pred_fallthru
    _
  // Predicated region
  $region10: #{regression_forward.1} parent=0 // pred_check
    _
  $region11: #{regression_forward.1} parent=0 // pred_check_branch
    %23 = sbr.rel (0) target = $region13
  $region12: #{regression_forward.1} parent=0 // pred_region
    _
  $region13: #{regression_forward.1} parent=0 // pred_fallthru
    _
  // Predicated region
  $region14: #{regression_forward.1} parent=0 // pred_check
    _
  $region15: #{regression_forward.1} parent=0 // pred_check_branch
    %25 = sbr.rel (0) target = $region17
  $region16: #{regression_forward.1} parent=0 // pred_region
    _
  $region17: #{regression_forward.1} parent=0 // pred_fallthru
    _
  // Predicated region
  $region18: #{regression_forward.1} parent=0 // pred_check
    _
  $region19: #{regression_forward.1} parent=0 // pred_check_branch
    %27 = sbr.rel (0) target = $region21
  $region20: #{regression_forward.1} parent=0 // pred_region
    _
  $region21: #{regression_forward.1} parent=0 // pred_fallthru
    _
  // Predicated region
  $region22: #{regression_forward.1} parent=0 // pred_check
    _
  $region23: #{regression_forward.1} parent=0 // pred_check_branch
    %29 = sbr.rel (0) target = $region25
  $region24: #{regression_forward.1} parent=0 // pred_region
    _
  $region25: #{regression_forward.1} parent=0 // pred_fallthru
    _
  // Predicated region
  $region26: #{regression_forward.1} parent=0 // pred_check
    _
  $region27: #{regression_forward.1} parent=0 // pred_check_branch
    %31 = sbr.rel (0) target = $region29
  $region28: #{regression_forward.1} parent=0 // pred_region
    _
  $region29: #{regression_forward.1} parent=0 // pred_fallthru
    _
  // Predicated region
  $region30: #{regression_forward.1} parent=0 // pred_check
    _
  $region31: #{regression_forward.1} parent=0 // pred_check_branch
    %33 = sbr.rel (0) target = $region33
  $region32: #{regression_forward.1} parent=0 // pred_region
    _
  $region33: #{regression_forward.1} parent=0 // pred_fallthru
    _
  // Predicated region
  $region34: #{regression_forward.1} parent=0 // pred_check
    _
  $region35: #{regression_forward.1} parent=0 // pred_check_branch
    %35 = sbr.rel (0) target = $region37
  $region36: #{regression_forward.1} parent=0 // pred_region
    _
  $region37: #{regression_forward.1} parent=0 // pred_fallthru
    _
  // Predicated region
  $region38: #{regression_forward.1} parent=0 // pred_check
    _
  $region39: #{regression_forward.1} parent=0 // pred_check_branch
    %37 = sbr.rel (0) target = $region41
  $region40: #{regression_forward.1} parent=0 // pred_region
    _
  $region41: #{regression_forward.1} parent=0 // pred_fallthru
    _
  // Predicated region
  $region42: #{regression_forward.1} parent=0 // pred_check
    _
  $region43: #{regression_forward.1} parent=0 // pred_check_branch
    %39 = sbr.rel (0) target = $region45
  $region44: #{regression_forward.1} parent=0 // pred_region
    _
  $region45: #{regression_forward.1} parent=0 // pred_fallthru
    _
  %v41 = vld [vmem:[%s0] sm:$0xff]
  %v42 = vld [vmem:[%s0 + $0x8] sm:$0xff]
  %v43 = vld [vmem:[%s0 + $0x10] sm:$0xff]
  %v44 = vld [vmem:[%s0 + $0x18] sm:$0xff]
  %v45 = vld [vmem:[%s0 + $0x20] sm:$0xff]
  %v46 = vld [vmem:[%s0 + $0x28] sm:$0xff]
  %v47 = vld [vmem:[%s0 + $0x30] sm:$0xff]
  %v48 = vld [vmem:[%s0 + $0x38] sm:$0xff]
  %v49 = vld [vmem:[%s0 + $0x40] sm:$0xff]
  %v50 = vld [vmem:[%s0 + $0x48] sm:$0xff]
  %v51 = vld [vmem:[%s0 + $0x50] sm:$0xff]
  %v52 = vld [vmem:[%s0 + $0x58] sm:$0xff]
  %v53 = vld [vmem:[%s0 + $0x60] sm:$0xff]
  %v54 = vld [vmem:[%s0 + $0x68] sm:$0xff]
  %v55 = vld [vmem:[%s0 + $0x70] sm:$0xff]
  %v56 = vld [vmem:[%s0 + $0x78] sm:$0xff]
  %v57 = vpack.c.bf16 %v42, %v41
  %v58 = vpack.c.bf16 %v44, %v43
  %v59 = vpack.c.bf16 %v46, %v45
  %v60 = vpack.c.bf16 %v48, %v47
  %v61 = vpack.c.bf16 %v50, %v49
  %v62 = vpack.c.bf16 %v52, %v51
  %v63 = vpack.c.bf16 %v54, %v53
  %v64 = vpack.c.bf16 %v56, %v55
  %v65 = vld [vmem:[%s1] sm:$0xf]
  %v66 = vld [vmem:[%s1 + $0x4] sm:$0xf]
  %v67 = vld [vmem:[%s1 + $0x8] sm:$0xf]
  %v68 = vld [vmem:[%s1 + $0xc] sm:$0xf]
  %v69 = vld [vmem:[%s2] sm:$0xff]
  %v70 = vld [vmem:[%s2 + $0x8] sm:$0xff]
  %v71 = vld [vmem:[%s2 + $0x10] sm:$0xff]
  %v72 = vld [vmem:[%s2 + $0x18] sm:$0xff]
  %74 = vset.pattern.permute.xlu0 0
  %75 = vperm.xlu0 %74, %v69
  %v76 = vpop.permute.xlu0 %75
  %79 = vset.pattern.permute.xlu0 0
  %80 = vperm.xlu0 %79, %v70
  %v81 = vpop.permute.xlu0 %80
  %84 = vset.pattern.permute.xlu0 0
  %85 = vperm.xlu0 %84, %v71
  %v86 = vpop.permute.xlu0 %85
  %89 = vset.pattern.permute.xlu0 0
  %90 = vperm.xlu0 %89, %v72
  %v91 = vpop.permute.xlu0 %90
  %v97 = vunpack.c.l.b16 %v65
  %v98 = vunpack.c.l.b16 %v66
  %v99 = vunpack.c.l.b16 %v67
  %v100 = vunpack.c.l.b16 %v68
  %v101 = vpack.c.b16 %v98, %v97
  %v102 = vpack.c.b16 %v100, %v99
  %vm103 = vcmask 523264
  %v105 = vsel %vm103, %v101, 0
  %v108 = vsel %vm103, %v102, 0
  %v111 = vsel %vm103, %v57, 0
  %v114 = vsel %vm103, %v58, 0
  %v117 = vsel %vm103, %v59, 0
  %v120 = vsel %vm103, %v60, 0
  %v123 = vsel %vm103, %v61, 0
  %v126 = vsel %vm103, %v62, 0
  %v129 = vsel %vm103, %v63, 0
  %v132 = vsel %vm103, %v64, 0
  %134 = vmatpush.bf16.xpose.msra.mxu0 %v132
  %135 = vmatpush.bf16.xpose.msra.mxu0 %v129
  %136 = vmatpush.bf16.xpose.msra.mxu0 %v126
  %137 = vmatpush.bf16.xpose.msra.mxu0 %v123
  %138 = vmatpush.bf16.xpose.msra.mxu0 %v120
  %139 = vmatpush.bf16.xpose.msra.mxu0 %v117
  %140 = vmatpush.bf16.xpose.msra.mxu0 %v114
  %141 = vmatpush.bf16.xpose.msra.mxu0 %v111
  %142 = vmatmul.bf16.gmra.mxu0 %v105
  %v143 = vpop.f32.mrf.mxu0
  %v144 = vadd.f32 %v76, %v143
  %v145 = vpop.f32.mrf.mxu0
  %v146 = vadd.f32 %v81, %v145
  %147 = vmatmul.bf16.gmra.mxu0 %v108
  %v148 = vpop.f32.mrf.mxu0
  %v149 = vadd.f32 %v86, %v148
  %v150 = vpop.f32.mrf.mxu0
  %v151 = vadd.f32 %v91, %v150
  %152 = vdwg.mxu0
  %v153 = vmax.f32 %v144, 0.0
  %v154 = vmax.f32 %v146, 0.0
  %v155 = vmax.f32 %v149, 0.0
  %v156 = vmax.f32 %v151, 0.0
  %v157 = vld [vmem:[%s3] sm:$0xf]
  %v158 = vld [vmem:[%s3 + $0x4] sm:$0xf]
  %v159 = vpack.c.bf16 %v154, %v153
  %v160 = vpack.c.bf16 %v156, %v155
  %v161 = vld [vmem:[%s4] sm:$0xff]
  %v162 = vld [vmem:[%s4 + $0x8] sm:$0xff]
  %164 = vset.pattern.permute.xlu0 0
  %165 = vperm.xlu0 %164, %v161
  %v166 = vpop.permute.xlu0 %165
  %169 = vset.pattern.permute.xlu0 0
  %170 = vperm.xlu0 %169, %v162
  %v171 = vpop.permute.xlu0 %170
  %v175 = vunpack.c.l.b16 %v157
  %v176 = vunpack.c.l.b16 %v158
  %v177 = vpack.c.b16 %v176, %v175
  %vm178 = vcmask 261120
  %v180 = vsel %vm178, %v177, 0
  %182 = vmatpush.bf16.msra.mxu0 0
  %183 = vmatpush.bf16.msra.mxu0 0
  %184 = vmatpush.bf16.msra.mxu0 0
  %185 = vmatpush.bf16.msra.mxu0 0
  %186 = vmatpush.bf16.msra.mxu0 0
  %187 = vmatpush.bf16.msra.mxu0 0
  %188 = vmatpush.bf16.msra.mxu0 %v160
  %189 = vmatpush.bf16.msra.mxu0 %v159
  %190 = vmatmul.bf16.gmra.mxu0 %v180
  %v191 = vpop.f32.mrf.mxu0
  %v192 = vadd.f32 %v166, %v191
  %v193 = vpop.f32.mrf.mxu0
  %v194 = vadd.f32 %v171, %v193
  %195 = vdwg.mxu0
  %v196 = vmax.f32 %v192, 0.0
  %v197 = vmax.f32 %v194, 0.0
  %v198 = vld [vmem:[%s5] sm:$0xf]
  %v199 = vpack.c.bf16 %v197, %v196
  %v200 = vld [vmem:[%s6] sm:$0xff]
  %202 = vset.pattern.permute.xlu0 0
  %203 = vperm.xlu0 %202, %v200
  %v204 = vpop.permute.xlu0 %203
  %vm206 = vcmask 130048
  %v208 = vsel %vm206, %v198, 0
  %210 = vmatpush.bf16.msra.mxu0 0
  %211 = vmatpush.bf16.msra.mxu0 0
  %212 = vmatpush.bf16.msra.mxu0 0
  %213 = vmatpush.bf16.msra.mxu0 0
  %214 = vmatpush.bf16.msra.mxu0 0
  %215 = vmatpush.bf16.msra.mxu0 0
  %216 = vmatpush.bf16.msra.mxu0 0
  %217 = vmatpush.bf16.msra.mxu0 %v199
  %218 = vmatmul.bf16.gmra.mxu0 %v208
  %v219 = vpop.f32.mrf.mxu0
  %v220 = vadd.f32 %v204, %v219
  %v221 = vpop.f32.mrf.mxu0
  %222 = vdwg.mxu0
  %v223 = vmax.f32 %v220, 0.0
  %v224 = vld [vmem:[%s7] sm:$0x3]
  %v225 = vpack.c.bf16 %v223, %v223
  %v226 = vld [vmem:[%s8] sm:$0xf]
  %228 = vset.pattern.permute.xlu0 0
  %229 = vperm.xlu0 %228, %v226
  %v230 = vpop.permute.xlu0 %229
  %vm232 = vcmask 64512
  %v234 = vsel %vm232, %v224, 0
  %vm236 = vcmask 1043456
  %v238 = vsel %vm236, %v225, 0
  %240 = vmatpush.bf16.msra.mxu0 0
  %241 = vmatpush.bf16.msra.mxu0 0
  %242 = vmatpush.bf16.msra.mxu0 0
  %243 = vmatpush.bf16.msra.mxu0 0
  %244 = vmatpush.bf16.msra.mxu0 0
  %245 = vmatpush.bf16.msra.mxu0 0
  %246 = vmatpush.bf16.msra.mxu0 0
  %247 = vmatpush.bf16.msra.mxu0 %v238
  %248 = vmatmul.bf16.gmra.mxu0 %v234
  %v249 = vpop.f32.mrf.mxu0
  %v250 = vadd.f32 %v230, %v249
  %v251 = vpop.f32.mrf.mxu0
  %252 = vdwg.mxu0
  %v253 = vmax.f32 %v250, 0.0
  %v254 = vld [vmem:[%s9] sm:$0x1]
  %v255 = vpack.c.bf16 %v253, %v253
  %v256 = vld [vmem:[#allocation2] sm:$0x1]
  %258 = vset.pattern.permute.xlu0 0
  %259 = vperm.xlu0 %258, %v256
  %v260 = vpop.permute.xlu0 %259
  %v262 = vperm.slane %v260, 0
  %vm263 = vcmask 31744
  %v265 = vsel %vm263, %v254, 0
  %vm267 = vcmask 1041408
  %v269 = vsel %vm267, %v255, 0
  %271 = vmatpush.bf16.msra.mxu0 0
  %272 = vmatpush.bf16.msra.mxu0 0
  %273 = vmatpush.bf16.msra.mxu0 0
  %274 = vmatpush.bf16.msra.mxu0 0
  %275 = vmatpush.bf16.msra.mxu0 0
  %276 = vmatpush.bf16.msra.mxu0 0
  %277 = vmatpush.bf16.msra.mxu0 0
  %278 = vmatpush.bf16.msra.mxu0 %v269
  %279 = vmatmul.bf16.gmra.mxu0 %v265
  %v280 = vpop.f32.mrf.mxu0
  %v281 = vadd.f32 %v262, %v280
  %v282 = vpop.f32.mrf.mxu0
  %283 = vdwg.mxu0
  %v284 = vmax.f32 %v281, 0.0
  %285 = vst [vmem:[%s11] sm:$0x1] %v284
  // Predicated region
  $region46: #{regression_forward.1} parent=0 // pred_check
    _
  $region47: #{regression_forward.1} parent=0 // pred_check_branch
    %287 = sbr.rel (0) target = $region49
  $region48: #{regression_forward.1} parent=0 // pred_region
    _
  $region49: #{regression_forward.1} parent=0 // pred_fallthru
    _
  // Predicated region
  $region50: #{regression_forward.1} parent=0 // pred_check
    _
  $region51: #{regression_forward.1} parent=0 // pred_check_branch
    %289 = sbr.rel (0) target = $region53
  $region52: #{regression_forward.1} parent=0 // pred_region
    _
  $region53: #{regression_forward.1} parent=0 // pred_fallthru
    _

</llo_original>
